<compile_context>
chip_gen: v5e
topology: v5e:2x2
jax: 0.10.0
libtpu: 0.0.40
codegen_flags: <defaults>
</compile_context>

<pallas_src>
import jax
import jax.numpy as jnp
from jax.experimental import pallas as pl
from jax.experimental.pallas import tpu as pltpu

# ----------------------------- hyper-parameters ------------------------------
D_EMB = 32                 # d_emb (hidden_dim of the ViT)
D_HID = 4 * D_EMB          # 128 -> exactly one TPU lane width
BATCH = 2
SEQ = 17                   # tokens per image (16 patches + class token)

_GRID_THRESHOLD = 512      # below this, a grid-less fully-resident call wins
_TM_GRID = 256             # row tile when gridded (multiple of 8, MXU-friendly)


def _round_up(n, m):
    return ((n + m - 1) // m) * m


# ------------------------------- Pallas kernel -------------------------------
def _ffn_kernel(x_ref, w1_ref, b1_ref, w2_ref, b2_ref, o_ref):
    """Fused Linear -> LeakyReLU -> Linear on an (M, d_emb) slab.

    x/w1/w2 are bf16 (MXU-native), accumulation + bias + activation in f32.
    """
    h = jnp.dot(x_ref[...], w1_ref[...], preferred_element_type=jnp.float32)
    h = h + b1_ref[...]                                # (M, 4d) f32
    h = jnp.where(h > 0, h, 0.01 * h)                  # LeakyReLU(0.01), f32 VPU
    # TODO(synk): nn.Dropout(p=0.2) is identity at inference; train-mode
    # mask + 1/(1-p) scaling intentionally omitted.
    out = jnp.dot(h.astype(jnp.bfloat16), w2_ref[...],
                  preferred_element_type=jnp.float32)
    o_ref[...] = out + b2_ref[...]


# --------------------------------- wrapper ------------------------------------
def feedforward(x, w1, b1, w2, b2):
    """x: (..., d_emb) -> (..., d_emb). One fused pallas_call."""
    orig_shape = x.shape
    d = orig_shape[-1]
    d_hid = w1.shape[1]
    x2d = x.reshape(-1, d)                 # fold batch/seq into matmul M-dim
    m = x2d.shape[0]

    # bf16 matmul operands (halves weight VMEM/HBM traffic, MXU-native).
    xb = x2d.astype(jnp.bfloat16)
    w1b = w1.astype(jnp.bfloat16)
    w2b = w2.astype(jnp.bfloat16)
    b1r = b1.reshape(1, d_hid).astype(jnp.float32)
    b2r = b2.reshape(1, d).astype(jnp.float32)

    use_grid = m > _GRID_THRESHOLD
    tm = _TM_GRID if use_grid else _round_up(m, 8)
    m_pad = _round_up(m, tm)
    if m_pad != m:
        xb = jnp.pad(xb, ((0, m_pad - m), (0, 0)))

    flops = 4 * m_pad * d * d_hid                      # two matmuls
    bytes_accessed = (xb.size * 2 + w1b.size * 2 + w2b.size * 2
                      + b1r.size * 4 + b2r.size * 4 + m_pad * d * 4)
    cost = pl.CostEstimate(flops=flops, transcendentals=0,
                           bytes_accessed=bytes_accessed)

    if not use_grid:
        # Latency-bound micro case: single grid-less call, all operands in VMEM.
        vmem = pl.BlockSpec(memory_space=pltpu.MemorySpace.VMEM)
        out = pl.pallas_call(
            _ffn_kernel,
            out_shape=jax.ShapeDtypeStruct((m_pad, d), jnp.float32),
            in_specs=[vmem, vmem, vmem, vmem, vmem],
            out_specs=vmem,
            cost_estimate=cost,
        )(xb, w1b, b1r, w2b, b2r)
    else:
        # Batched case: tile the padded token dim, weights resident across steps,
        # parallel semantics so v7x's two TensorCores both get rows.
        out = pl.pallas_call(
            _ffn_kernel,
            out_shape=jax.ShapeDtypeStruct((m_pad, d), jnp.float32),
            grid=(m_pad // tm,),
            in_specs=[
                pl.BlockSpec((tm, d), lambda i: (i, 0)),
                pl.BlockSpec((d, d_hid), lambda i: (0, 0)),
                pl.BlockSpec((1, d_hid), lambda i: (0, 0)),
                pl.BlockSpec((d_hid, d), lambda i: (0, 0)),
                pl.BlockSpec((1, d), lambda i: (0, 0)),
            ],
            out_specs=pl.BlockSpec((tm, d), lambda i: (i, 0)),
            compiler_params=pltpu.CompilerParams(
                dimension_semantics=("parallel",)),
            cost_estimate=cost,
        )(xb, w1b, b1r, w2b, b2r)

    return out[:m].reshape(orig_shape).astype(x.dtype)


# --------------------------- pure-JAX references ------------------------------
def feedforward_ref(x, w1, b1, w2, b2, mixed=False):
    """mixed=True mimics the kernel's bf16-operand / f32-accumulate arithmetic."""
    if mixed:
        xm, w1m, w2m = (x.astype(jnp.bfloat16), w1.astype(jnp.bfloat16),
                        w2.astype(jnp.bfloat16))
    else:
        xm, w1m, w2m = x, w1, w2
    h = jnp.dot(xm, w1m, preferred_element_type=jnp.float32) + b1
    h = jnp.where(h > 0, h, 0.01 * h)
    if mixed:
        h = h.astype(jnp.bfloat16)
    return jnp.dot(h, w2m, preferred_element_type=jnp.float32) + b2


# ------------------------------------ main ------------------------------------
if __name__ == "__main__":
    key = jax.random.PRNGKey(0)
    kx, k1, k2, k3, k4, kbig = jax.random.split(key, 6)

    # deterministic small inputs / params
    x = jax.random.normal(kx, (BATCH, SEQ, D_EMB), jnp.float32)
    w1 = 0.1 * jax.random.normal(k1, (D_EMB, D_HID), jnp.float32)
    b1 = 0.1 * jax.random.normal(k2, (D_HID,), jnp.float32)
    w2 = 0.1 * jax.random.normal(k3, (D_HID, D_EMB), jnp.float32)
    b2 = 0.1 * jax.random.normal(k4, (D_EMB,), jnp.float32)

    # Small (grid-less, fully VMEM-resident) path.
    out = jax.block_until_ready(feedforward(x, w1, b1, w2, b2))
    assert out.shape == (BATCH, SEQ, D_EMB), out.shape
    ref_mixed = feedforward_ref(x, w1, b1, w2, b2, mixed=True)
    ref_f32 = feedforward_ref(x, w1, b1, w2, b2, mixed=False)
    assert jnp.allclose(out, ref_mixed, rtol=1e-3, atol=1e-3), (
        "Pallas output differs from bf16-matched JAX reference")
    assert jnp.allclose(out, ref_f32, rtol=5e-2, atol=5e-2), (
        "Pallas output differs from f32 JAX reference beyond bf16 tolerance")

    # Larger batch exercises the gridded (multi-TensorCore-friendly) path.
    x_big = jax.random.normal(kbig, (32, SEQ, D_EMB), jnp.float32)
    out_big = jax.block_until_ready(feedforward(x_big, w1, b1, w2, b2))
    assert out_big.shape == x_big.shape, out_big.shape
    assert jnp.allclose(out_big,
                        feedforward_ref(x_big, w1, b1, w2, b2, mixed=True),
                        rtol=1e-3, atol=1e-3), (
        "Gridded-path output differs from bf16-matched JAX reference")

    print("KERNEL_OK")
</pallas_src>

<mosaic_0001>
module attributes {stable_mosaic.version = 11 : i64} {
  func.func @_ffn_kernel(%arg0: memref<40x32xbf16, #tpu.memory_space<vmem>>, %arg1: memref<32x128xbf16, #tpu.memory_space<vmem>>, %arg2: memref<1x128xf32, #tpu.memory_space<vmem>>, %arg3: memref<128x32xbf16, #tpu.memory_space<vmem>>, %arg4: memref<1x32xf32, #tpu.memory_space<vmem>>, %arg5: memref<40x32xf32, #tpu.memory_space<vmem>>) attributes {dimension_semantics = [], scalar_prefetch = 0 : i64, scratch_operands = 0 : i64, tpu.core_type = #tpu.core_type<tc>} {
    %c0 = arith.constant 0 : index
    %c0_0 = arith.constant 0 : index
    %0 = vector.load %arg0[%c0, %c0_0] : memref<40x32xbf16, #tpu.memory_space<vmem>>, vector<40x32xbf16>
    %c0_1 = arith.constant 0 : index
    %c0_2 = arith.constant 0 : index
    %1 = vector.load %arg1[%c0_1, %c0_2] : memref<32x128xbf16, #tpu.memory_space<vmem>>, vector<32x128xbf16>
    %cst = arith.constant dense<0.000000e+00> : vector<40x128xf32>
    %2 = tpu.matmul %0, %1, %cst {dimension_numbers = #tpu.dot_dimension_numbers<[1], [0], [0], [1], [0, 0, 1, 1], [], []>} : vector<40x32xbf16>, vector<32x128xbf16>, vector<40x128xf32> -> vector<40x128xf32>
    %c0_3 = arith.constant 0 : index
    %c0_4 = arith.constant 0 : index
    %3 = vector.load %arg2[%c0_3, %c0_4] : memref<1x128xf32, #tpu.memory_space<vmem>>, vector<1x128xf32>
    %4 = vector.broadcast %3 : vector<1x128xf32> to vector<40x128xf32>
    %5 = arith.addf %2, %4 : vector<40x128xf32>
    %cst_5 = arith.constant 0.000000e+00 : f32
    %6 = vector.broadcast %cst_5 : f32 to vector<40x128xf32>
    %7 = arith.cmpf ogt, %5, %6 : vector<40x128xf32>
    %cst_6 = arith.constant 0.00999999977 : f32
    %8 = vector.broadcast %cst_6 : f32 to vector<40x128xf32>
    %9 = arith.mulf %8, %5 : vector<40x128xf32>
    %10 = arith.select %7, %5, %9 : vector<40x128xi1>, vector<40x128xf32>
    %11 = arith.truncf %10 : vector<40x128xf32> to vector<40x128xbf16>
    %c0_7 = arith.constant 0 : index
    %c0_8 = arith.constant 0 : index
    %12 = vector.load %arg3[%c0_7, %c0_8] : memref<128x32xbf16, #tpu.memory_space<vmem>>, vector<128x32xbf16>
    %cst_9 = arith.constant dense<0.000000e+00> : vector<40x32xf32>
    %13 = tpu.matmul %11, %12, %cst_9 {dimension_numbers = #tpu.dot_dimension_numbers<[1], [0], [0], [1], [0, 0, 1, 1], [], []>} : vector<40x128xbf16>, vector<128x32xbf16>, vector<40x32xf32> -> vector<40x32xf32>
    %c0_10 = arith.constant 0 : index
    %c0_11 = arith.constant 0 : index
    %14 = vector.load %arg4[%c0_10, %c0_11] : memref<1x32xf32, #tpu.memory_space<vmem>>, vector<1x32xf32>
    %15 = vector.broadcast %14 : vector<1x32xf32> to vector<40x32xf32>
    %16 = arith.addf %13, %15 : vector<40x32xf32>
    %c0_12 = arith.constant 0 : index
    %c0_13 = arith.constant 0 : index
    %17 = vector.load %arg5[%c0_12, %c0_13] : memref<40x32xf32, #tpu.memory_space<vmem>>, vector<40x32xf32>
    tpu.vector_store %arg5[%c0_12, %c0_13], %16 {strides = array<i32>} : memref<40x32xf32, #tpu.memory_space<vmem>>, vector<40x32xf32>,
    return
  }
}

</mosaic_0001>

<llo_original>
// kernel: tpu_custom_call.1
$region0: #{tpu_custom_call.1}
  #allocation0 [shape = 'u32[]', space=smem, size = 0x4, offset = 0x4, fixed_abs, tag = 'smem constant byte address 0x4 - core index']
  #allocation1 [shape = 'u32[72,128]{1,0:T(1,128)}', space=vmem, size = 0x9000, scoped, tag = 'internal scratch']
  %s0 = inlined_call_operand.vmem [shape: bf16[40,32], index: 0, kind: input, shape index: {}]
  %s1 = inlined_call_operand.vmem [shape: bf16[32,128], index: 1, kind: input, shape index: {}]
  %s2 = inlined_call_operand.vmem [shape: f32[1,128], index: 2, kind: input, shape index: {}]
  %s3 = inlined_call_operand.vmem [shape: bf16[128,32], index: 3, kind: input, shape index: {}]
  %s4 = inlined_call_operand.vmem [shape: f32[1,32], index: 4, kind: input, shape index: {}]
  %s5 = inlined_call_operand.vmem [shape: f32[40,32], index: 5, kind: output, shape index: {}]
  %s6 = sld [smem:[#allocation0]]
  $region30: #{tpu_custom_call.1} parent=0
    _
  %s8 = ssub.s32 1, %s6
  %s9 = scalar_select 0, %s8, %s6
  // Predicated region
  $region2: #{tpu_custom_call.1} parent=0 // pred_check
    _
  $region3: #{tpu_custom_call.1} parent=0 // pred_check_branch
    %11 = sbr.rel (0) target = $region5
  $region4: #{tpu_custom_call.1} parent=0 // pred_region
    _
  $region5: #{tpu_custom_call.1} parent=0 // pred_fallthru
    _
  // Predicated region
  $region6: #{tpu_custom_call.1} parent=0 // pred_check
    _
  $region7: #{tpu_custom_call.1} parent=0 // pred_check_branch
    %13 = sbr.rel (0) target = $region9
  $region8: #{tpu_custom_call.1} parent=0 // pred_region
    _
  $region9: #{tpu_custom_call.1} parent=0 // pred_fallthru
    _
  // Predicated region
  $region10: #{tpu_custom_call.1} parent=0 // pred_check
    _
  $region11: #{tpu_custom_call.1} parent=0 // pred_check_branch
    %15 = sbr.rel (0) target = $region13
  $region12: #{tpu_custom_call.1} parent=0 // pred_region
    _
  $region13: #{tpu_custom_call.1} parent=0 // pred_fallthru
    _
  // Predicated region
  $region14: #{tpu_custom_call.1} parent=0 // pred_check
    _
  $region15: #{tpu_custom_call.1} parent=0 // pred_check_branch
    %17 = sbr.rel (0) target = $region17
  $region16: #{tpu_custom_call.1} parent=0 // pred_region
    _
  $region17: #{tpu_custom_call.1} parent=0 // pred_fallthru
    _
  // Predicated region
  $region18: #{tpu_custom_call.1} parent=0 // pred_check
    _
  $region19: #{tpu_custom_call.1} parent=0 // pred_check_branch
    %19 = sbr.rel (0) target = $region21
  $region20: #{tpu_custom_call.1} parent=0 // pred_region
    _
  $region21: #{tpu_custom_call.1} parent=0 // pred_fallthru
    _
  %v21 = vld [vmem:[%s0] sm:$0xf]
  %v22 = vld [vmem:[%s0 + $0x4] sm:$0xf]
  %v23 = vld [vmem:[%s0 + $0x8] sm:$0xf]
  %v24 = vld [vmem:[%s0 + $0xc] sm:$0xf]
  %v25 = vld [vmem:[%s0 + $0x10] sm:$0xf]
  %v26 = vld [vmem:[%s1] sm:$0xf]
  %v27 = vld [vmem:[%s1 + $0x4] sm:$0xf]
  %v28 = vld [vmem:[%s1 + $0x8] sm:$0xf]
  %v29 = vld [vmem:[%s1 + $0xc] sm:$0xf]
  %v30 = vld [vmem:[%s2] sm:$0x1]
  %v32 = vperm.slane %v30, 0
  %v39 = vunpack.c.l.b16 %v21
  %v40 = vunpack.c.l.b16 %v22
  %v41 = vunpack.c.l.b16 %v23
  %v42 = vunpack.c.l.b16 %v24
  %v43 = vunpack.c.l.b16 %v25
  %v44 = vpack.c.b16 %v40, %v39
  %v45 = vpack.c.b16 %v42, %v41
  %v46 = vpack.c.b16 %v43, %v43
  %v51 = vunpack.c.l.b16 %v26
  %v52 = vunpack.c.l.b16 %v27
  %v53 = vunpack.c.l.b16 %v28
  %v54 = vunpack.c.l.b16 %v29
  %v55 = vpack.c.b16 %v52, %v51
  %v56 = vpack.c.b16 %v54, %v53
  %vm59 = vcmask 261120
  %v61 = vsel %vm59, %v44, 0
  %v64 = vsel %vm59, %v45, 0
  %v67 = vsel %vm59, %v46, 0
  %69 = vmatpush.bf16.msra.mxu0 0
  %70 = vmatpush.bf16.msra.mxu0 0
  %71 = vmatpush.bf16.msra.mxu0 0
  %72 = vmatpush.bf16.msra.mxu0 0
  %73 = vmatpush.bf16.msra.mxu0 0
  %74 = vmatpush.bf16.msra.mxu0 0
  %75 = vmatpush.bf16.msra.mxu0 %v56
  %76 = vmatpush.bf16.msra.mxu0 %v55
  %77 = vmatmul.bf16.gmra.mxu0 %v61
  %v78 = vpop.f32.mrf.mxu0
  %v79 = vadd.f32 %v32, %v78
  %v80 = vpop.f32.mrf.mxu0
  %v81 = vadd.f32 %v32, %v80
  %82 = vmatmul.bf16.gmra.mxu0 %v64
  %v83 = vpop.f32.mrf.mxu0
  %v84 = vadd.f32 %v32, %v83
  %v85 = vpop.f32.mrf.mxu0
  %v86 = vadd.f32 %v32, %v85
  %87 = vmatmul.bf16.gmra.mxu0 %v67
  %v88 = vpop.f32.mrf.mxu0
  %v89 = vadd.f32 %v32, %v88
  %v90 = vpop.f32.mrf.mxu0
  %91 = vdwg.mxu0
  %vm92 = vcmp.gt.f32.partialorder %v79, 0.0
  %vm93 = vcmp.gt.f32.partialorder %v81, 0.0
  %vm94 = vcmp.gt.f32.partialorder %v84, 0.0
  %vm95 = vcmp.gt.f32.partialorder %v86, 0.0
  %vm96 = vcmp.gt.f32.partialorder %v89, 0.0
  %v97 = vmul.f32 %v79, 0.01
  %v98 = vmul.f32 %v81, 0.01
  %v99 = vmul.f32 %v84, 0.01
  %v100 = vmul.f32 %v86, 0.01
  %v101 = vmul.f32 %v89, 0.01
  %v102 = vsel %vm92, %v79, %v97
  %v103 = vsel %vm93, %v81, %v98
  %v104 = vsel %vm94, %v84, %v99
  %v105 = vsel %vm95, %v86, %v100
  %v106 = vsel %vm96, %v89, %v101
  %v107 = vpack.c.bf16 %v103, %v102
  %v108 = vpack.c.bf16 %v105, %v104
  %v109 = vpack.c.bf16 %v106, %v106
  %v110 = vld [vmem:[%s3] sm:$0xf]
  %v111 = vld [vmem:[%s3 + $0x4] sm:$0xf]
  %v112 = vld [vmem:[%s3 + $0x8] sm:$0xf]
  %v113 = vld [vmem:[%s3 + $0xc] sm:$0xf]
  %v114 = vld [vmem:[%s3 + $0x10] sm:$0xf]
  %v115 = vld [vmem:[%s3 + $0x14] sm:$0xf]
  %v116 = vld [vmem:[%s3 + $0x18] sm:$0xf]
  %v117 = vld [vmem:[%s3 + $0x1c] sm:$0xf]
  %v118 = vld [vmem:[%s3 + $0x20] sm:$0xf]
  %v119 = vld [vmem:[%s3 + $0x24] sm:$0xf]
  %v120 = vld [vmem:[%s3 + $0x28] sm:$0xf]
  %v121 = vld [vmem:[%s3 + $0x2c] sm:$0xf]
  %v122 = vld [vmem:[%s3 + $0x30] sm:$0xf]
  %v123 = vld [vmem:[%s3 + $0x34] sm:$0xf]
  %v124 = vld [vmem:[%s3 + $0x38] sm:$0xf]
  %v125 = vld [vmem:[%s3 + $0x3c] sm:$0xf]
  %v126 = vld [vmem:[%s4] sm:$0x1]
  %v128 = vperm.slane %v126, 0
  %v146 = vunpack.c.l.b16 %v110
  %v147 = vunpack.c.l.b16 %v111
  %v148 = vunpack.c.l.b16 %v112
  %v149 = vunpack.c.l.b16 %v113
  %v150 = vunpack.c.l.b16 %v114
  %v151 = vunpack.c.l.b16 %v115
  %v152 = vunpack.c.l.b16 %v116
  %v153 = vunpack.c.l.b16 %v117
  %v154 = vunpack.c.l.b16 %v118
  %v155 = vunpack.c.l.b16 %v119
  %v156 = vunpack.c.l.b16 %v120
  %v157 = vunpack.c.l.b16 %v121
  %v158 = vunpack.c.l.b16 %v122
  %v159 = vunpack.c.l.b16 %v123
  %v160 = vunpack.c.l.b16 %v124
  %v161 = vunpack.c.l.b16 %v125
  %v162 = vpack.c.b16 %v147, %v146
  %v163 = vpack.c.b16 %v149, %v148
  %v164 = vpack.c.b16 %v151, %v150
  %v165 = vpack.c.b16 %v153, %v152
  %v166 = vpack.c.b16 %v155, %v154
  %v167 = vpack.c.b16 %v157, %v156
  %v168 = vpack.c.b16 %v159, %v158
  %v169 = vpack.c.b16 %v161, %v160
  %178 = vmatpush.bf16.msra.mxu0 %v169
  %179 = vmatpush.bf16.msra.mxu0 %v168
  %180 = vmatpush.bf16.msra.mxu0 %v167
  %181 = vmatpush.bf16.msra.mxu0 %v166
  %182 = vmatpush.bf16.msra.mxu0 %v165
  %183 = vmatpush.bf16.msra.mxu0 %v164
  %184 = vmatpush.bf16.msra.mxu0 %v163
  %185 = vmatpush.bf16.msra.mxu0 %v162
  %186 = vmatmul.bf16.gmra.mxu0 %v107
  %v187 = vpop.f32.mrf.mxu0
  %v188 = vadd.f32 %v128, %v187
  %v189 = vpop.f32.mrf.mxu0
  %v190 = vadd.f32 %v128, %v189
  %191 = vmatmul.bf16.gmra.mxu0 %v108
  %v192 = vpop.f32.mrf.mxu0
  %v193 = vadd.f32 %v128, %v192
  %v194 = vpop.f32.mrf.mxu0
  %v195 = vadd.f32 %v128, %v194
  %196 = vmatmul.bf16.gmra.mxu0 %v109
  %v197 = vpop.f32.mrf.mxu0
  %v198 = vadd.f32 %v128, %v197
  %v199 = vpop.f32.mrf.mxu0
  %200 = vdwg.mxu0
  %201 = vst.msk [vmem:[%s5] sm:$0xff] %vm59, %v188
  %202 = vst.msk [vmem:[%s5 + $0x8] sm:$0xff] %vm59, %v190
  %203 = vst.msk [vmem:[%s5 + $0x10] sm:$0xff] %vm59, %v193
  %204 = vst.msk [vmem:[%s5 + $0x18] sm:$0xff] %vm59, %v195
  %205 = vst.msk [vmem:[%s5 + $0x20] sm:$0xff] %vm59, %v198
  // Predicated region
  $region22: #{tpu_custom_call.1} parent=0 // pred_check
    _
  $region23: #{tpu_custom_call.1} parent=0 // pred_check_branch
    %207 = sbr.rel (0) target = $region25
  $region24: #{tpu_custom_call.1} parent=0 // pred_region
    _
  $region25: #{tpu_custom_call.1} parent=0 // pred_fallthru
    _
  // Predicated region
  $region26: #{tpu_custom_call.1} parent=0 // pred_check
    _
  $region27: #{tpu_custom_call.1} parent=0 // pred_check_branch
    %209 = sbr.rel (0) target = $region29
  $region28: #{tpu_custom_call.1} parent=0 // pred_region
    _
  $region29: #{tpu_custom_call.1} parent=0 // pred_fallthru
    _

</llo_original>
